<compile_context>
chip_gen: v6e
topology: v6e:2x2x1
jax: 0.10.0
libtpu: 0.0.40
codegen_flags: <defaults>
</compile_context>

<pallas_src>
import math
from functools import partial

import jax
import jax.numpy as jnp
from jax.experimental import pallas as pl
from jax.experimental.pallas import tpu as pltpu


def _rowwise_linear_kernel(x_ref, w_ref, o_ref, *, use_mxu):
    # x_ref: (TB, TH, W)   block of TB batch rows x TH "height" rows
    # w_ref: (TH, O, W)    matching per-row weight matrices
    # o_ref: (TB, TH, O)   output block (no in-kernel relayout/reshape)
    x = x_ref[...]
    w = w_ref[...]
    if use_mxu:
        # Large-batch path: per-row (TB, W) @ (W, O) on the MXU with the batch
        # block as the M dimension; bf16 inputs feed the MXU directly, f32 acc.
        out = jnp.einsum("bhw,how->bho", x, w,
                         preferred_element_type=jnp.float32)
    else:
        # Tiny-batch path: MXU occupancy would be <1%, so do the contraction
        # on the VPU instead.  Cast to f32 after the (possibly bf16) load:
        # bf16 is storage-only (v5e VPU has no bf16 ALUs).
        xf = x.astype(jnp.float32)
        wf = w.astype(jnp.float32)
        out = jnp.sum(xf[:, :, None, :] * wf[None, :, :, :], axis=-1)
    o_ref[...] = out.astype(o_ref.dtype)


def _vmem_capacity_bytes():
    """Per-core VMEM capacity; conservative fallback is v7x's 64 MiB."""
    try:
        return int(pltpu.get_tpu_info().vmem_capacity_bytes)
    except Exception:
        return 64 << 20


def _row_granule(in_itemsize):
    # Second-to-last block dim must be a multiple of the sublane packing
    # (8 for 4-byte, 16 for 2-byte, 32 for 1-byte dtypes) unless full-extent.
    return {1: 32, 2: 16, 4: 8}.get(in_itemsize, 8)


def _divisor_blocks(n, granule):
    """Divisors of n that are legal tiled sizes (multiple of granule) or n itself, largest first."""
    opts = {n}
    for t in range(granule, n, granule):
        if n % t == 0:
            opts.add(t)
    return sorted(opts, reverse=True)


def _leading_blocks(n):
    """Divisors of n (leading block dims have no tiling granule), largest first."""
    return sorted({t for t in range(1, n + 1) if n % t == 0}, reverse=True)


def _choose_blocks(B, H, W, O, in_itemsize, out_itemsize, budget_bytes):
    granule = _row_granule(in_itemsize)

    def tile_bytes(tb, th):
        # 2 pipeline buffers per array (x tile + w tile + out tile).
        return 2 * (tb * th * W * in_itemsize
                    + th * O * W * in_itemsize
                    + tb * th * O * out_itemsize)

    tb_opts = _leading_blocks(B)
    th_opts = _divisor_blocks(H, granule)

    # Fallback when nothing fits the budget: the SMALLEST legal tile
    # (previous revision incorrectly fell back to the largest).
    tb, th = tb_opts[-1], th_opts[-1]
    found = False
    for cand_tb in tb_opts:                 # prefer keeping the batch block big
        for cand_th in th_opts:             # then the largest row block that fits
            if tile_bytes(cand_tb, cand_th) <= budget_bytes:
                tb, th = cand_tb, cand_th
                found = True
                break
        if found:
            break

    # v7x has 2 TensorCores per chip: a non-trivial problem should have >= 2
    # grid steps on a "parallel" axis, otherwise half the chip idles.
    total_bytes = (in_itemsize * (B * H * W + H * O * W)
                   + out_itemsize * B * H * O)
    if total_bytes >= (4 << 20) and (B // tb) * (H // th) < 2:
        split = next((t for t in th_opts
                      if H // t >= 2 and tile_bytes(tb, t) <= budget_bytes), None)
        if split is not None:
            th = split
        else:
            split = next((t for t in tb_opts
                          if B // t >= 2 and tile_bytes(t, th) <= budget_bytes), None)
            if split is not None:
                tb = split

    return tb, th


def rowwise_linear(x, weights, *, compute_dtype=None,
                   batch_block=None, row_block=None):
    """Per-row linear map matching torch.matmul(weights, x.unsqueeze(-1)).

    x: (..., H, W), weights: (H, O, W) -> (..., H, O, 1).

    compute_dtype: optional storage dtype for the kernel inputs (e.g.
      jnp.bfloat16 to halve HBM traffic for this bandwidth-bound op);
      accumulation and the output stay in x.dtype.
    """
    *lead, H, W = x.shape
    Hw, O, Ww = weights.shape
    if (Hw, Ww) != (H, W):
        raise ValueError(f"weights shape {weights.shape} incompatible with x shape {x.shape}")

    out_dtype = x.dtype
    B = int(math.prod(lead)) if lead else 1
    x3 = x.reshape(B, H, W)                       # free metadata reshape

    if compute_dtype is not None:
        x3 = x3.astype(compute_dtype)
        weights = weights.astype(compute_dtype)

    in_itemsize = jnp.dtype(x3.dtype).itemsize
    out_itemsize = jnp.dtype(out_dtype).itemsize

    # Generation-aware VMEM budget: <= ~16 MiB on v7x (64 MiB/TC), ~24 MiB on
    # v5e/v6e (128 MiB), always leaving headroom for double-buffering/scratch.
    vmem_cap = _vmem_capacity_bytes()
    budget = min(24 << 20, vmem_cap // 4)

    tb, th = _choose_blocks(B, H, W, O, in_itemsize, out_itemsize, budget)

    if batch_block is not None:
        if B % batch_block != 0:
            raise ValueError(f"batch_block={batch_block} must divide batch size {B}")
        tb = batch_block
    if row_block is not None:
        granule = _row_granule(in_itemsize)
        if H % row_block != 0:
            raise ValueError(f"row_block={row_block} must divide height {H}")
        if row_block != H and row_block % granule != 0:
            raise ValueError(
                f"row_block={row_block} must be a multiple of {granule} for dtype "
                f"{x3.dtype} unless it equals the full height {H}")
        th = row_block

    grid = (B // tb, H // th)
    # Batch block is the matmul M dimension; below ~64 the MXU would be mostly
    # idle, so the kernel uses the VPU formulation instead.
    use_mxu = tb >= 64

    chosen_bytes = 2 * (tb * th * W * in_itemsize
                        + th * O * W * in_itemsize
                        + tb * th * O * out_itemsize)
    vmem_limit = int(min(vmem_cap, max(32 << 20, chosen_bytes + (8 << 20))))

    out3 = pl.pallas_call(
        partial(_rowwise_linear_kernel, use_mxu=use_mxu),
        out_shape=jax.ShapeDtypeStruct((B, H, O), out_dtype),
        grid_spec=pltpu.PrefetchScalarGridSpec(
            num_scalar_prefetch=0,
            grid=grid,
            in_specs=[
                pl.BlockSpec((tb, th, W), lambda b, h: (b, h, 0)),
                pl.BlockSpec((th, O, W), lambda b, h: (h, 0, 0)),
            ],
            out_specs=pl.BlockSpec((tb, th, O), lambda b, h: (b, h, 0)),
        ),
        compiler_params=pltpu.CompilerParams(
            # Both grid axes are independent work -> megacore-shardable.
            dimension_semantics=("parallel", "parallel"),
            vmem_limit_bytes=vmem_limit,
        ),
    )(x3, weights)

    # Pure metadata reshape: (B, H, O) -> (..., H, O, 1).
    return out3.reshape(*lead, H, O, 1)


if __name__ == "__main__":
    # Small demo shapes for CORRECTNESS only — do not draw performance
    # conclusions here (dispatch overhead dominates at ~3 KB of data).
    batch = 2
    height = 8
    width = 32
    out_width = 16

    key = jax.random.PRNGKey(0)
    k_w, k_x = jax.random.split(key)

    # Deterministic init matching nn.init.uniform_(-sqrt(1/out_width), sqrt(1/out_width)).
    bound = math.sqrt(1.0 / out_width)
    weights = jax.random.uniform(
        k_w, (height, out_width, width), dtype=jnp.float32,
        minval=-bound, maxval=bound,
    )
    x = jax.random.normal(k_x, (batch, height, width), dtype=jnp.float32)

    ref = jnp.einsum("how,bhw->bho", weights, x)[..., None]

    # 1) f32 end-to-end: exact-semantics check.
    out_f32 = jax.block_until_ready(rowwise_linear(x, weights))
    assert out_f32.shape == (batch, height, out_width, 1)
    assert out_f32.dtype == x.dtype
    assert jnp.allclose(out_f32, ref, atol=1e-5, rtol=1e-5)

    # 2) bf16-storage path (recommended for production: halves HBM traffic;
    #    f32 accumulation and f32 output are kept).
    out_bf16 = jax.block_until_ready(
        rowwise_linear(x, weights, compute_dtype=jnp.bfloat16))
    assert out_bf16.shape == (batch, height, out_width, 1)
    assert jnp.allclose(out_bf16, ref, atol=2e-2, rtol=2e-2)

    print("KERNEL_OK")
</pallas_src>

<mosaic_0001>
module attributes {stable_mosaic.version = 11 : i64} {
  func.func @_rowwise_linear_kernel(%arg0: i32, %arg1: i32, %arg2: memref<2x8x32xf32, #tpu.memory_space<vmem>>, %arg3: memref<8x16x32xf32, #tpu.memory_space<vmem>>, %arg4: memref<2x8x16xf32, #tpu.memory_space<vmem>>) attributes {dimension_semantics = [#tpu.dimension_semantics<parallel>, #tpu.dimension_semantics<parallel>], iteration_bounds = array<i64: 1, 1>, scalar_prefetch = 0 : i64, scratch_operands = 0 : i64, tpu.core_type = #tpu.core_type<tc>, window_params = [{transform_indices = @transform_0, window_bounds = array<i64: 2, 8, 32>}, {transform_indices = @transform_1, window_bounds = array<i64: 8, 16, 32>}, {transform_indices = @transform_2, window_bounds = array<i64: 2, 8, 16>}]} {
    %c0 = arith.constant 0 : index
    %c0_0 = arith.constant 0 : index
    %c0_1 = arith.constant 0 : index
    %0 = vector.load %arg2[%c0, %c0_0, %c0_1] : memref<2x8x32xf32, #tpu.memory_space<vmem>>, vector<2x8x32xf32>
    %c0_2 = arith.constant 0 : index
    %c0_3 = arith.constant 0 : index
    %c0_4 = arith.constant 0 : index
    %1 = vector.load %arg3[%c0_2, %c0_3, %c0_4] : memref<8x16x32xf32, #tpu.memory_space<vmem>>, vector<8x16x32xf32>
    %2 = vector.shape_cast %0 : vector<2x8x32xf32> to vector<2x8x1x32xf32>
    %3 = vector.shape_cast %1 : vector<8x16x32xf32> to vector<1x8x16x32xf32>
    %4 = vector.broadcast %2 : vector<2x8x1x32xf32> to vector<2x8x16x32xf32>
    %5 = vector.broadcast %3 : vector<1x8x16x32xf32> to vector<2x8x16x32xf32>
    %6 = arith.mulf %4, %5 : vector<2x8x16x32xf32>
    %cst = arith.constant dense<0.000000e+00> : vector<2x8x16xf32>
    %7 = vector.multi_reduction <add>, %6, %cst [3] : vector<2x8x16x32xf32> to vector<2x8x16xf32>
    %c0_5 = arith.constant 0 : index
    %c0_6 = arith.constant 0 : index
    %c0_7 = arith.constant 0 : index
    %8 = vector.load %arg4[%c0_5, %c0_6, %c0_7] : memref<2x8x16xf32, #tpu.memory_space<vmem>>, vector<2x8x16xf32>
    tpu.vector_store %arg4[%c0_5, %c0_6, %c0_7], %7 {strides = array<i32>} : memref<2x8x16xf32, #tpu.memory_space<vmem>>, vector<2x8x16xf32>,
    return
  }
  func.func @transform_0(%arg0: i32, %arg1: i32) -> (i32, i32, i32) {
    %c0_i32 = arith.constant 0 : i32
    %c0_i32_0 = arith.constant 0 : i32
    return %arg0, %arg1, %c0_i32 : i32, i32, i32
  }
  func.func @transform_1(%arg0: i32, %arg1: i32) -> (i32, i32, i32) {
    %c0_i32 = arith.constant 0 : i32
    %c0_i32_0 = arith.constant 0 : i32
    %c0_i32_1 = arith.constant 0 : i32
    return %arg1, %c0_i32, %c0_i32_0 : i32, i32, i32
  }
  func.func @transform_2(%arg0: i32, %arg1: i32) -> (i32, i32, i32) {
    %c0_i32 = arith.constant 0 : i32
    %c0_i32_0 = arith.constant 0 : i32
    return %arg0, %arg1, %c0_i32 : i32, i32, i32
  }
}

</mosaic_0001>

<llo_original>
// kernel: tpu_custom_call.1
$region0: #{tpu_custom_call.1}
  #allocation0 [shape = 'u32[]', space=smem, size = 0x4, offset = 0x4, fixed_abs, tag = 'smem constant byte address 0x4 - core index']
  #allocation1 [shape = 'u32[144,128]{1,0:T(1,128)}', space=vmem, size = 0x12000, scoped, tag = 'internal scratch']
  %s0 = inlined_call_operand.hbm [shape: f32[2,8,32], index: 0, kind: input, shape index: {}]
  %s1 = inlined_call_operand.hbm [shape: f32[8,16,32], index: 1, kind: input, shape index: {}]
  %s2 = inlined_call_operand.hbm [shape: f32[2,8,16], index: 2, kind: output, shape index: {}]
  %s3 = sld [smem:[#allocation0]]
  $region26: #{tpu_custom_call.1} parent=0
    _
  %s5 = ssub.s32 1, %s3
  %s6 = scalar_select 0, %s5, %s3
  $region1: #{tpu_custom_call.1} parent=0
    #allocation2 [shape = 'u8[8192]{0}', space=vmem, size = 0x2000, scoped, tag = 'input window, operand 0, single buffered']
    #allocation3 [shape = 's32[1]{0}', space=sflag, size = 0x4, scoped, tag = 'scoped memory for tpu_custom_call.1']
    #allocation4 [shape = 's32[1]{0}', space=sflag, size = 0x4, scoped, tag = 'scoped memory for tpu_custom_call.1']
    #allocation5 [shape = 'u8[65536]{0}', space=vmem, size = 0x10000, scoped, tag = 'input window, operand 1, single buffered']
    #allocation6 [shape = 's32[1]{0}', space=sflag, size = 0x4, scoped, tag = 'scoped memory for tpu_custom_call.1']
    #allocation7 [shape = 'u8[8192]{0}', space=vmem, size = 0x2000, scoped, tag = 'output window, operand 0, single buffered']
    %7 = vsyncpa [#allocation3], 0
    %8 = vsyncpa [#allocation6], 0
    %9 = vsyncpa [#allocation4], 0
    // Predicated region
    $region2: #{tpu_custom_call.1} parent=1 // pred_check
      _
    $region3: #{tpu_custom_call.1} parent=1 // pred_check_branch
      %11 = sbr.rel (0) target = $region5
    $region4: #{tpu_custom_call.1} parent=1 // pred_region
      %s13 = ssub.s32 256, 256
      %14 = vsyncadd [#allocation3], %s13
      %s15 = sshll.u32 [#allocation2], 4
      %s16 = int_to_ptr.vmem [resolvable:$true] %s15
      %21 = dma.hbm_to_vmem [thread:$0]  %s0, 256, %s16, [#allocation3], 128, 128, 8
    $region5: #{tpu_custom_call.1} parent=1 // pred_fallthru
      _
    // Predicated region
    $region6: #{tpu_custom_call.1} parent=1 // pred_check
      _
    $region7: #{tpu_custom_call.1} parent=1 // pred_check_branch
      %23 = sbr.rel (0) target = $region9
    $region8: #{tpu_custom_call.1} parent=1 // pred_region
      %s25 = ssub.s32 2048, 2048
      %26 = vsyncadd [#allocation6], %s25
      %s27 = sshll.u32 [#allocation5], 4
      %s28 = int_to_ptr.vmem [resolvable:$true] %s27
      %33 = dma.hbm_to_vmem [thread:$0]  %s1, 2048, %s28, [#allocation6], 128, 128, 8
    $region9: #{tpu_custom_call.1} parent=1 // pred_fallthru
      _
    // Predicated region
    $region10: #{tpu_custom_call.1} parent=1 // pred_check
      _
    $region11: #{tpu_custom_call.1} parent=1 // pred_check_branch
      %35 = sbr.rel (0) target = $region13
    $region12: #{tpu_custom_call.1} parent=1 // pred_region
      %36 = dma.done [#allocation3], 256
    $region13: #{tpu_custom_call.1} parent=1 // pred_fallthru
      _
    // Predicated region
    $region14: #{tpu_custom_call.1} parent=1 // pred_check
      _
    $region15: #{tpu_custom_call.1} parent=1 // pred_check_branch
      %38 = sbr.rel (0) target = $region17
    $region16: #{tpu_custom_call.1} parent=1 // pred_region
      %39 = dma.done [#allocation6], 2048
    $region17: #{tpu_custom_call.1} parent=1 // pred_fallthru
      _
    %v40 = vld [vmem:[#allocation2] sm:$0xff]
    %v41 = vld [vmem:[#allocation2 + $0x8] sm:$0xff]
    %v42 = vld [vmem:[#allocation5] sm:$0xff]
    %v43 = vld [vmem:[#allocation5 + $0x8] sm:$0xff]
    %v44 = vld [vmem:[#allocation5 + $0x10] sm:$0xff]
    %v45 = vld [vmem:[#allocation5 + $0x18] sm:$0xff]
    %v46 = vld [vmem:[#allocation5 + $0x20] sm:$0xff]
    %v47 = vld [vmem:[#allocation5 + $0x28] sm:$0xff]
    %v48 = vld [vmem:[#allocation5 + $0x30] sm:$0xff]
    %v49 = vld [vmem:[#allocation5 + $0x38] sm:$0xff]
    %v50 = vld [vmem:[#allocation5 + $0x40] sm:$0xff]
    %v51 = vld [vmem:[#allocation5 + $0x48] sm:$0xff]
    %v52 = vld [vmem:[#allocation5 + $0x50] sm:$0xff]
    %v53 = vld [vmem:[#allocation5 + $0x58] sm:$0xff]
    %v54 = vld [vmem:[#allocation5 + $0x60] sm:$0xff]
    %v55 = vld [vmem:[#allocation5 + $0x68] sm:$0xff]
    %v56 = vld [vmem:[#allocation5 + $0x70] sm:$0xff]
    %v57 = vld [vmem:[#allocation5 + $0x78] sm:$0xff]
    %v60 = vcombine.high %v40, %v40
    %v62 = vunpack.c.l.s4 1966171168
    %v63 = vunpack.c.0.s8 %v62
    %v64 = vlaneseq
    %v65 = vshrl.u32 %v64, 7
    %v66 = vsub.s32 %v63, %v65
    %v67 = vrot.slane %v40, %v66
    %v69 = vunpack.c.l.s4 1966171168
    %v70 = vunpack.c.0.s8 %v69
    %v71 = vlaneseq
    %v72 = vshrl.u32 %v71, 7
    %v73 = vsub.s32 %v70, %v72
    %v74 = vrot.slane %v60, %v73
    %v75 = vcombine.high %v67, %v67
    %v76 = vcombine.high %v74, %v74
    %v78 = vunpack.c.l.s4 1966171168
    %v79 = vunpack.c.0.s8 %v78
    %v80 = vlaneseq
    %v81 = vshrl.u32 %v80, 7
    %v82 = vsub.s32 %v79, %v81
    %v83 = vrot.slane %v67, %v82
    %v85 = vunpack.c.l.s4 1966171168
    %v86 = vunpack.c.0.s8 %v85
    %v87 = vlaneseq
    %v88 = vshrl.u32 %v87, 7
    %v89 = vsub.s32 %v86, %v88
    %v90 = vrot.slane %v74, %v89
    %v92 = vunpack.c.l.s4 1966171168
    %v93 = vunpack.c.0.s8 %v92
    %v94 = vlaneseq
    %v95 = vshrl.u32 %v94, 7
    %v96 = vsub.s32 %v93, %v95
    %v97 = vrot.slane %v75, %v96
    %v99 = vunpack.c.l.s4 1966171168
    %v100 = vunpack.c.0.s8 %v99
    %v101 = vlaneseq
    %v102 = vshrl.u32 %v101, 7
    %v103 = vsub.s32 %v100, %v102
    %v104 = vrot.slane %v76, %v103
    %v105 = vcombine.high %v83, %v83
    %v106 = vcombine.high %v90, %v90
    %v107 = vcombine.high %v97, %v97
    %v108 = vcombine.high %v104, %v104
    %v109 = vcombine.high %v41, %v41
    %v111 = vunpack.c.l.s4 1966171168
    %v112 = vunpack.c.0.s8 %v111
    %v113 = vlaneseq
    %v114 = vshrl.u32 %v113, 7
    %v115 = vsub.s32 %v112, %v114
    %v116 = vrot.slane %v41, %v115
    %v118 = vunpack.c.l.s4 1966171168
    %v119 = vunpack.c.0.s8 %v118
    %v120 = vlaneseq
    %v121 = vshrl.u32 %v120, 7
    %v122 = vsub.s32 %v119, %v121
    %v123 = vrot.slane %v109, %v122
    %v124 = vcombine.high %v116, %v116
    %v125 = vcombine.high %v123, %v123
    %v127 = vunpack.c.l.s4 1966171168
    %v128 = vunpack.c.0.s8 %v127
    %v129 = vlaneseq
    %v130 = vshrl.u32 %v129, 7
    %v131 = vsub.s32 %v128, %v130
    %v132 = vrot.slane %v116, %v131
    %v134 = vunpack.c.l.s4 1966171168
    %v135 = vunpack.c.0.s8 %v134
    %v136 = vlaneseq
    %v137 = vshrl.u32 %v136, 7
    %v138 = vsub.s32 %v135, %v137
    %v139 = vrot.slane %v123, %v138
    %v141 = vunpack.c.l.s4 1966171168
    %v142 = vunpack.c.0.s8 %v141
    %v143 = vlaneseq
    %v144 = vshrl.u32 %v143, 7
    %v145 = vsub.s32 %v142, %v144
    %v146 = vrot.slane %v124, %v145
    %v148 = vunpack.c.l.s4 1966171168
    %v149 = vunpack.c.0.s8 %v148
    %v150 = vlaneseq
    %v151 = vshrl.u32 %v150, 7
    %v152 = vsub.s32 %v149, %v151
    %v153 = vrot.slane %v125, %v152
    %v154 = vcombine.high %v132, %v132
    %v155 = vcombine.high %v139, %v139
    %v156 = vcombine.high %v146, %v146
    %v157 = vcombine.high %v153, %v153
    %v158 = vlaneseq
    %v159 = vshrl.u32 %v158, 7
    %v160 = vsub.s32 0, %v159
    %v161 = vrot.slane %v83, %v160
    %v162 = vlaneseq
    %v163 = vshrl.u32 %v162, 7
    %v164 = vsub.s32 0, %v163
    %v165 = vrot.slane %v97, %v164
    %v166 = vlaneseq
    %v167 = vshrl.u32 %v166, 7
    %v168 = vsub.s32 0, %v167
    %v169 = vrot.slane %v105, %v168
    %v170 = vlaneseq
    %v171 = vshrl.u32 %v170, 7
    %v172 = vsub.s32 0, %v171
    %v173 = vrot.slane %v107, %v172
    %v174 = vlaneseq
    %v175 = vshrl.u32 %v174, 7
    %v176 = vsub.s32 0, %v175
    %v177 = vrot.slane %v90, %v176
    %v178 = vlaneseq
    %v179 = vshrl.u32 %v178, 7
    %v180 = vsub.s32 0, %v179
    %v181 = vrot.slane %v104, %v180
    %v182 = vlaneseq
    %v183 = vshrl.u32 %v182, 7
    %v184 = vsub.s32 0, %v183
    %v185 = vrot.slane %v106, %v184
    %v186 = vlaneseq
    %v187 = vshrl.u32 %v186, 7
    %v188 = vsub.s32 0, %v187
    %v189 = vrot.slane %v108, %v188
    %v190 = vlaneseq
    %v191 = vshrl.u32 %v190, 7
    %v192 = vsub.s32 0, %v191
    %v193 = vrot.slane %v132, %v192
    %v194 = vlaneseq
    %v195 = vshrl.u32 %v194, 7
    %v196 = vsub.s32 0, %v195
    %v197 = vrot.slane %v146, %v196
    %v198 = vlaneseq
    %v199 = vshrl.u32 %v198, 7
    %v200 = vsub.s32 0, %v199
    %v201 = vrot.slane %v154, %v200
    %v202 = vlaneseq
    %v203 = vshrl.u32 %v202, 7
    %v204 = vsub.s32 0, %v203
    %v205 = vrot.slane %v156, %v204
    %v206 = vlaneseq
    %v207 = vshrl.u32 %v206, 7
    %v208 = vsub.s32 0, %v207
    %v209 = vrot.slane %v139, %v208
    %v210 = vlaneseq
    %v211 = vshrl.u32 %v210, 7
    %v212 = vsub.s32 0, %v211
    %v213 = vrot.slane %v153, %v212
    %v214 = vlaneseq
    %v215 = vshrl.u32 %v214, 7
    %v216 = vsub.s32 0, %v215
    %v217 = vrot.slane %v155, %v216
    %v218 = vlaneseq
    %v219 = vshrl.u32 %v218, 7
    %v220 = vsub.s32 0, %v219
    %v221 = vrot.slane %v157, %v220
    %v238 = vmul.f32 %v161, %v42
    %v239 = vmul.f32 %v161, %v43
    %v240 = vmul.f32 %v165, %v44
    %v241 = vmul.f32 %v165, %v45
    %v242 = vmul.f32 %v169, %v46
    %v243 = vmul.f32 %v169, %v47
    %v244 = vmul.f32 %v173, %v48
    %v245 = vmul.f32 %v173, %v49
    %v246 = vmul.f32 %v177, %v50
    %v247 = vmul.f32 %v177, %v51
    %v248 = vmul.f32 %v181, %v52
    %v249 = vmul.f32 %v181, %v53
    %v250 = vmul.f32 %v185, %v54
    %v251 = vmul.f32 %v185, %v55
    %v252 = vmul.f32 %v189, %v56
    %v253 = vmul.f32 %v189, %v57
    %v254 = vmul.f32 %v193, %v42
    %v255 = vmul.f32 %v193, %v43
    %v256 = vmul.f32 %v197, %v44
    %v257 = vmul.f32 %v197, %v45
    %v258 = vmul.f32 %v201, %v46
    %v259 = vmul.f32 %v201, %v47
    %v260 = vmul.f32 %v205, %v48
    %v261 = vmul.f32 %v205, %v49
    %v262 = vmul.f32 %v209, %v50
    %v263 = vmul.f32 %v209, %v51
    %v264 = vmul.f32 %v213, %v52
    %v265 = vmul.f32 %v213, %v53
    %v266 = vmul.f32 %v217, %v54
    %v267 = vmul.f32 %v217, %v55
    %v268 = vmul.f32 %v221, %v56
    %v269 = vmul.f32 %v221, %v57
    %vm270 = vcmask 261120
    %v271 = vsel %vm270, %v238, 0.0
    %272 = vadd.xlane.f32.xlu0 %v271
    %v273 = vpop.xlane.xlu0 %272
    %v274 = vsel %vm270, %v239, 0.0
    %275 = vadd.xlane.f32.xlu0 %v274
    %v276 = vpop.xlane.xlu0 %275
    %v277 = vsel %vm270, %v240, 0.0
    %278 = vadd.xlane.f32.xlu0 %v277
    %v279 = vpop.xlane.xlu0 %278
    %v280 = vsel %vm270, %v241, 0.0
    %281 = vadd.xlane.f32.xlu0 %v280
    %v282 = vpop.xlane.xlu0 %281
    %v283 = vsel %vm270, %v242, 0.0
    %284 = vadd.xlane.f32.xlu0 %v283
    %v285 = vpop.xlane.xlu0 %284
    %v286 = vsel %vm270, %v243, 0.0
    %287 = vadd.xlane.f32.xlu0 %v286
    %v288 = vpop.xlane.xlu0 %287
    %v289 = vsel %vm270, %v244, 0.0
    %290 = vadd.xlane.f32.xlu0 %v289
    %v291 = vpop.xlane.xlu0 %290
    %v292 = vsel %vm270, %v245, 0.0
    %293 = vadd.xlane.f32.xlu0 %v292
    %v294 = vpop.xlane.xlu0 %293
    %v295 = vsel %vm270, %v246, 0.0
    %296 = vadd.xlane.f32.xlu0 %v295
    %v297 = vpop.xlane.xlu0 %296
    %v298 = vsel %vm270, %v247, 0.0
    %299 = vadd.xlane.f32.xlu0 %v298
    %v300 = vpop.xlane.xlu0 %299
    %v301 = vsel %vm270, %v248, 0.0
    %302 = vadd.xlane.f32.xlu0 %v301
    %v303 = vpop.xlane.xlu0 %302
    %v304 = vsel %vm270, %v249, 0.0
    %305 = vadd.xlane.f32.xlu0 %v304
    %v306 = vpop.xlane.xlu0 %305
    %v307 = vsel %vm270, %v250, 0.0
    %308 = vadd.xlane.f32.xlu0 %v307
    %v309 = vpop.xlane.xlu0 %308
    %v310 = vsel %vm270, %v251, 0.0
    %311 = vadd.xlane.f32.xlu0 %v310
    %v312 = vpop.xlane.xlu0 %311
    %v313 = vsel %vm270, %v252, 0.0
    %314 = vadd.xlane.f32.xlu0 %v313
    %v315 = vpop.xlane.xlu0 %314
    %v316 = vsel %vm270, %v253, 0.0
    %317 = vadd.xlane.f32.xlu0 %v316
    %v318 = vpop.xlane.xlu0 %317
    %v319 = vsel %vm270, %v254, 0.0
    %320 = vadd.xlane.f32.xlu0 %v319
    %v321 = vpop.xlane.xlu0 %320
    %v322 = vsel %vm270, %v255, 0.0
    %323 = vadd.xlane.f32.xlu0 %v322
    %v324 = vpop.xlane.xlu0 %323
    %v325 = vsel %vm270, %v256, 0.0
    %326 = vadd.xlane.f32.xlu0 %v325
    %v327 = vpop.xlane.xlu0 %326
    %v328 = vsel %vm270, %v257, 0.0
    %329 = vadd.xlane.f32.xlu0 %v328
    %v330 = vpop.xlane.xlu0 %329
    %v331 = vsel %vm270, %v258, 0.0
    %332 = vadd.xlane.f32.xlu0 %v331
    %v333 = vpop.xlane.xlu0 %332
    %v334 = vsel %vm270, %v259, 0.0
    %335 = vadd.xlane.f32.xlu0 %v334
    %v336 = vpop.xlane.xlu0 %335
    %v337 = vsel %vm270, %v260, 0.0
    %338 = vadd.xlane.f32.xlu0 %v337
    %v339 = vpop.xlane.xlu0 %338
    %v340 = vsel %vm270, %v261, 0.0
    %341 = vadd.xlane.f32.xlu0 %v340
    %v342 = vpop.xlane.xlu0 %341
    %v343 = vsel %vm270, %v262, 0.0
    %344 = vadd.xlane.f32.xlu0 %v343
    %v345 = vpop.xlane.xlu0 %344
    %v346 = vsel %vm270, %v263, 0.0
    %347 = vadd.xlane.f32.xlu0 %v346
    %v348 = vpop.xlane.xlu0 %347
    %v349 = vsel %vm270, %v264, 0.0
    %350 = vadd.xlane.f32.xlu0 %v349
    %v351 = vpop.xlane.xlu0 %350
    %v352 = vsel %vm270, %v265, 0.0
    %353 = vadd.xlane.f32.xlu0 %v352
    %v354 = vpop.xlane.xlu0 %353
    %v355 = vsel %vm270, %v266, 0.0
    %356 = vadd.xlane.f32.xlu0 %v355
    %v357 = vpop.xlane.xlu0 %356
    %v358 = vsel %vm270, %v267, 0.0
    %359 = vadd.xlane.f32.xlu0 %v358
    %v360 = vpop.xlane.xlu0 %359
    %v361 = vsel %vm270, %v268, 0.0
    %362 = vadd.xlane.f32.xlu0 %v361
    %v363 = vpop.xlane.xlu0 %362
    %v364 = vsel %vm270, %v269, 0.0
    %365 = vadd.xlane.f32.xlu0 %v364
    %v366 = vpop.xlane.xlu0 %365
    %v399 = vlaneseq
    %v400 = vand.u32 %v399, 127
    %v401 = vlaneseq
    %v402 = vshrl.u32 %v401, 7
    %v403 = vsub.s32 %v400, %v402
    %v404 = vrot.slane %v273, %v403
    %v405 = vadd.s32 %v400, 4294967288
    %v406 = vlaneseq
    %v407 = vshrl.u32 %v406, 7
    %v408 = vsub.s32 %v405, %v407
    %v409 = vrot.slane %v276, %v408
    %vm410 = vcmask 130112
    %v411 = vsel %vm410, %v409, %v404
    %v412 = vlaneseq
    %v413 = vshrl.u32 %v412, 7
    %v414 = vsub.s32 %v400, %v413
    %v415 = vrot.slane %v279, %v414
    %v416 = vlaneseq
    %v417 = vshrl.u32 %v416, 7
    %v418 = vsub.s32 %v405, %v417
    %v419 = vrot.slane %v282, %v418
    %v420 = vsel %vm410, %v419, %v415
    %v421 = vlaneseq
    %v422 = vshrl.u32 %v421, 7
    %v423 = vsub.s32 %v400, %v422
    %v424 = vrot.slane %v285, %v423
    %v425 = vlaneseq
    %v426 = vshrl.u32 %v425, 7
    %v427 = vsub.s32 %v405, %v426
    %v428 = vrot.slane %v288, %v427
    %v429 = vsel %vm410, %v428, %v424
    %v430 = vlaneseq
    %v431 = vshrl.u32 %v430, 7
    %v432 = vsub.s32 %v400, %v431
    %v433 = vrot.slane %v291, %v432
    %v434 = vlaneseq
    %v435 = vshrl.u32 %v434, 7
    %v436 = vsub.s32 %v405, %v435
    %v437 = vrot.slane %v294, %v436
    %v438 = vsel %vm410, %v437, %v433
    %v439 = vlaneseq
    %v440 = vshrl.u32 %v439, 7
    %v441 = vsub.s32 %v400, %v440
    %v442 = vrot.slane %v297, %v441
    %v443 = vlaneseq
    %v444 = vshrl.u32 %v443, 7
    %v445 = vsub.s32 %v405, %v444
    %v446 = vrot.slane %v300, %v445
    %v447 = vsel %vm410, %v446, %v442
    %v448 = vlaneseq
    %v449 = vshrl.u32 %v448, 7
    %v450 = vsub.s32 %v400, %v449
    %v451 = vrot.slane %v303, %v450
    %v452 = vlaneseq
    %v453 = vshrl.u32 %v452, 7
    %v454 = vsub.s32 %v405, %v453
    %v455 = vrot.slane %v306, %v454
    %v456 = vsel %vm410, %v455, %v451
    %v457 = vlaneseq
    %v458 = vshrl.u32 %v457, 7
    %v459 = vsub.s32 %v400, %v458
    %v460 = vrot.slane %v309, %v459
    %v461 = vlaneseq
    %v462 = vshrl.u32 %v461, 7
    %v463 = vsub.s32 %v405, %v462
    %v464 = vrot.slane %v312, %v463
    %v465 = vsel %vm410, %v464, %v460
    %v466 = vlaneseq
    %v467 = vshrl.u32 %v466, 7
    %v468 = vsub.s32 %v400, %v467
    %v469 = vrot.slane %v315, %v468
    %v470 = vlaneseq
    %v471 = vshrl.u32 %v470, 7
    %v472 = vsub.s32 %v405, %v471
    %v473 = vrot.slane %v318, %v472
    %v474 = vsel %vm410, %v473, %v469
    %v475 = vlaneseq
    %v476 = vshrl.u32 %v475, 7
    %v477 = vsub.s32 %v400, %v476
    %v478 = vrot.slane %v321, %v477
    %v479 = vlaneseq
    %v480 = vshrl.u32 %v479, 7
    %v481 = vsub.s32 %v405, %v480
    %v482 = vrot.slane %v324, %v481
    %v483 = vsel %vm410, %v482, %v478
    %v484 = vlaneseq
    %v485 = vshrl.u32 %v484, 7
    %v486 = vsub.s32 %v400, %v485
    %v487 = vrot.slane %v327, %v486
    %v488 = vlaneseq
    %v489 = vshrl.u32 %v488, 7
    %v490 = vsub.s32 %v405, %v489
    %v491 = vrot.slane %v330, %v490
    %v492 = vsel %vm410, %v491, %v487
    %v493 = vlaneseq
    %v494 = vshrl.u32 %v493, 7
    %v495 = vsub.s32 %v400, %v494
    %v496 = vrot.slane %v333, %v495
    %v497 = vlaneseq
    %v498 = vshrl.u32 %v497, 7
    %v499 = vsub.s32 %v405, %v498
    %v500 = vrot.slane %v336, %v499
    %v501 = vsel %vm410, %v500, %v496
    %v502 = vlaneseq
    %v503 = vshrl.u32 %v502, 7
    %v504 = vsub.s32 %v400, %v503
    %v505 = vrot.slane %v339, %v504
    %v506 = vlaneseq
    %v507 = vshrl.u32 %v506, 7
    %v508 = vsub.s32 %v405, %v507
    %v509 = vrot.slane %v342, %v508
    %v510 = vsel %vm410, %v509, %v505
    %v511 = vlaneseq
    %v512 = vshrl.u32 %v511, 7
    %v513 = vsub.s32 %v400, %v512
    %v514 = vrot.slane %v345, %v513
    %v515 = vlaneseq
    %v516 = vshrl.u32 %v515, 7
    %v517 = vsub.s32 %v405, %v516
    %v518 = vrot.slane %v348, %v517
    %v519 = vsel %vm410, %v518, %v514
    %v520 = vlaneseq
    %v521 = vshrl.u32 %v520, 7
    %v522 = vsub.s32 %v400, %v521
    %v523 = vrot.slane %v351, %v522
    %v524 = vlaneseq
    %v525 = vshrl.u32 %v524, 7
    %v526 = vsub.s32 %v405, %v525
    %v527 = vrot.slane %v354, %v526
    %v528 = vsel %vm410, %v527, %v523
    %v529 = vlaneseq
    %v530 = vshrl.u32 %v529, 7
    %v531 = vsub.s32 %v400, %v530
    %v532 = vrot.slane %v357, %v531
    %v533 = vlaneseq
    %v534 = vshrl.u32 %v533, 7
    %v535 = vsub.s32 %v405, %v534
    %v536 = vrot.slane %v360, %v535
    %v537 = vsel %vm410, %v536, %v532
    %v538 = vlaneseq
    %v539 = vshrl.u32 %v538, 7
    %v540 = vsub.s32 %v400, %v539
    %v541 = vrot.slane %v363, %v540
    %v542 = vlaneseq
    %v543 = vshrl.u32 %v542, 7
    %v544 = vsub.s32 %v405, %v543
    %v545 = vrot.slane %v366, %v544
    %v546 = vsel %vm410, %v545, %v541
    %vm547 = vcmask 1041409
    %v548 = vsel %vm547, %v420, %v411
    %vm549 = vcmask 1042434
    %v550 = vsel %vm549, %v429, %v548
    %vm551 = vcmask 1043459
    %v552 = vsel %vm551, %v438, %v550
    %vm553 = vcmask 1044484
    %v554 = vsel %vm553, %v447, %v552
    %vm555 = vcmask 1045509
    %v556 = vsel %vm555, %v456, %v554
    %vm557 = vcmask 1046534
    %v558 = vsel %vm557, %v465, %v556
    %vm559 = vcmask 1047559
    %v560 = vsel %vm559, %v474, %v558
    %v561 = vsel %vm547, %v492, %v483
    %v562 = vsel %vm549, %v501, %v561
    %v563 = vsel %vm551, %v510, %v562
    %v564 = vsel %vm553, %v519, %v563
    %v565 = vsel %vm555, %v528, %v564
    %v566 = vsel %vm557, %v537, %v565
    %v567 = vsel %vm559, %v546, %v566
    %vm570 = vcmask 130048
    %571 = vst.msk [vmem:[#allocation7] sm:$0xff] %vm570, %v560
    %572 = vst.msk [vmem:[#allocation7 + $0x8] sm:$0xff] %vm570, %v567
    // Predicated region
    $region18: #{tpu_custom_call.1} parent=1 // pred_check
      _
    $region19: #{tpu_custom_call.1} parent=1 // pred_check_branch
      %574 = sbr.rel (0) target = $region21
    $region20: #{tpu_custom_call.1} parent=1 // pred_region
      %s576 = ssub.s32 256, 256
      %577 = vsyncadd [#allocation4], %s576
      %s578 = sshll.u32 [#allocation7], 4
      %s579 = int_to_ptr.vmem [resolvable:$true] %s578
      %584 = dma.vmem_to_hbm [thread:$0]  %s579, 256, %s2, [#allocation4], 128, 128, 8
    $region21: #{tpu_custom_call.1} parent=1 // pred_fallthru
      _
    // Predicated region
    $region22: #{tpu_custom_call.1} parent=1 // pred_check
      _
    $region23: #{tpu_custom_call.1} parent=1 // pred_check_branch
      %586 = sbr.rel (0) target = $region25
    $region24: #{tpu_custom_call.1} parent=1 // pred_region
      %587 = dma.done [#allocation4], 256
    $region25: #{tpu_custom_call.1} parent=1 // pred_fallthru
      _
    %588 = vsyncpa [#allocation3], 1
    %589 = vsyncpa [#allocation6], 1
    %590 = vsyncpa [#allocation4], 1

</llo_original>
